<compile_context>
chip_gen: v5e
topology: v5e:2x2
jax: 0.10.0
libtpu: 0.0.40
codegen_flags: <defaults>
</compile_context>

<pallas_src>
import jax
import jax.numpy as jnp
import numpy as np
from jax.experimental import pallas as pl
from jax.experimental.pallas import tpu as pltpu


def rel_embed_kernel(x_ref, yf_ref, w_ref, b_ref, o_ref):
    # x_ref : (1, TN, 3)   anchors (px, py, theta) for this N-tile
    # yf_ref: (1, 4, ME)   per-target rows [yx, yy, cos(yth), sin(yth)],
    #                      each value repeated E times along lanes (lane m*E+e -> target m)
    # w_ref : (4, ME)      Linear(4->E) weight, tiled M times along lanes (lane m*E+e -> w[:, e])
    # b_ref : (1, ME)      Linear bias, tiled M times along lanes
    # o_ref : (1, TN, ME)  flattened (m, e) output, fully lane-dense
    x = x_ref[0].astype(jnp.float32)           # (TN, 3)
    xx = x[:, 0:1]                             # (TN, 1)
    xy = x[:, 1:2]
    xth = x[:, 2:3]
    c = jnp.cos(xth)                           # (TN, 1)  -- only O(TN) transcendentals
    s = jnp.sin(xth)

    yf = yf_ref[0].astype(jnp.float32)         # (4, ME)
    yx = yf[0:1, :]                            # (1, ME)
    yy = yf[1:2, :]
    cy = yf[2:3, :]
    sy = yf[3:4, :]

    # relative position, rotated into the anchor frame:
    #   [dx, dy] @ [[c, -s], [s, c]]  ->  (dx*c + dy*s, -dx*s + dy*c)
    dx = yx - xx                               # (TN, ME)
    dy = yy - xy
    tx = dx * c + dy * s
    ty = dy * c - dx * s

    # cos/sin of the relative heading via angle addition (no per-element EUP):
    #   cos(yth - xth) = cy*c + sy*s ; sin(yth - xth) = sy*c - cy*s
    cth = cy * c + sy * s
    sth = sy * c - cy * s

    w = w_ref[...].astype(jnp.float32)         # (4, ME)
    bias = b_ref[...].astype(jnp.float32)      # (1, ME)

    # Linear(4 -> E) as 4 lane-dense FMAs (K=4 is too small for the MXU), + ReLU.
    out = tx * w[0:1, :] + ty * w[1:2, :] + cth * w[2:3, :] + sth * w[3:4, :] + bias
    o_ref[0] = jnp.maximum(out, 0.0).astype(o_ref.dtype)


def _choose_tile_n(n, me, target_bytes=1 << 20):
    """Largest TN that divides N, is a multiple of 8 (or == N), and keeps the
    f32 output block (TN * ME * 4 bytes) around ~1 MiB."""
    max_tn = target_bytes // (me * 4)
    if n <= max_tn or max_tn < 8:
        # Whole-N block (block dim == full array dim is always legal).
        # TODO(synk): for very large M*E, M should additionally be tiled.
        return n
    best = None
    for tn in range(8, int(max_tn) + 1, 8):
        if n % tn == 0:
            best = tn
    return best if best is not None else n


def relative_embedder(y, x, w, b):
    """y: (B, M, 3), x: (B, N, 3), w: (4, E), b: (E,) -> (B, N, M, E)."""
    B, M, _ = y.shape
    _, N, _ = x.shape
    E = w.shape[1]
    ME = M * E

    # --- wrapper-side layout glue (all O(B*M*E) / O(M*E), cheap vs. O(B*N*M*E)) ---
    yx = y[..., 0]
    yy = y[..., 1]
    yth = y[..., 2]
    y_feat = jnp.stack(
        [yx, yy, jnp.cos(yth), jnp.sin(yth)], axis=1).astype(jnp.float32)  # (B, 4, M)
    y_feat = jnp.repeat(y_feat, E, axis=-1)                                # (B, 4, M*E)

    w_t = jnp.tile(w.astype(jnp.float32), (1, M))                          # (4, M*E)
    b_t = jnp.tile(b.astype(jnp.float32).reshape(1, E), (1, M))            # (1, M*E)

    TN = _choose_tile_n(N, ME)
    grid = (B, N // TN)

    out_flat = pl.pallas_call(
        rel_embed_kernel,
        out_shape=jax.ShapeDtypeStruct((B, N, ME), jnp.float32),
        grid_spec=pltpu.PrefetchScalarGridSpec(
            num_scalar_prefetch=0,
            grid=grid,
            in_specs=[
                pl.BlockSpec((1, TN, 3), lambda bi, ni: (bi, ni, 0)),
                pl.BlockSpec((1, 4, ME), lambda bi, ni: (bi, 0, 0)),
                pl.BlockSpec((4, ME), lambda bi, ni: (0, 0)),
                pl.BlockSpec((1, ME), lambda bi, ni: (0, 0)),
            ],
            out_specs=pl.BlockSpec((1, TN, ME), lambda bi, ni: (bi, ni, 0)),
        ),
        compiler_params=pltpu.CompilerParams(
            dimension_semantics=("parallel", "parallel"),
            vmem_limit_bytes=32 * 1024 * 1024),
    )(x, y_feat, w_t, b_t)

    # Free reshape (row-major metadata only) back to the module's output layout.
    return out_flat.reshape(B, N, M, E)


def reference(y, x, w, b):
    """Pure-JAX mirror of the PyTorch forward (expand_theta=True)."""
    rel_pos = y[:, None, :, :2] - x[:, :, None, :2]        # (B, N, M, 2)
    rel_theta = y[:, None, :, 2:3] - x[:, :, None, 2:3]    # (B, N, M, 1)
    theta = x[..., 2]                                      # (B, N)
    c, s = jnp.cos(theta), jnp.sin(theta)
    rot = jnp.stack([jnp.stack([c, -s], -1),
                     jnp.stack([s, c], -1)], -2)           # (B, N, 2, 2)
    rot = rot[:, :, None, :, :]                            # (B, N, 1, 2, 2)
    transformed = jnp.matmul(rel_pos[..., None, :], rot)[..., 0, :]  # (B,N,M,2)
    inp = jnp.concatenate(
        [transformed, jnp.cos(rel_theta), jnp.sin(rel_theta)], -1)   # (B,N,M,4)
    return jnp.maximum(inp @ w + b, 0.0)


if __name__ == "__main__":
    # Small deterministic example: batch=2, N=8 anchors, M=8 targets, emb_dim=32
    B, N, M, E = 2, 8, 8, 32
    key = jax.random.PRNGKey(0)
    ky, kx, kw, kb = jax.random.split(key, 4)

    y = jax.random.normal(ky, (B, M, 3), dtype=jnp.float32)
    x = jax.random.normal(kx, (B, N, 3), dtype=jnp.float32)
    # Deterministic synthetic parameters for Linear(4 -> emb_dim)
    # (stored transposed as (4, E) so the kernel computes inp @ w + b).
    w = 0.1 * jax.random.normal(kw, (4, E), dtype=jnp.float32)
    b = 0.1 * jax.random.normal(kb, (E,), dtype=jnp.float32)

    out = relative_embedder(y, x, w, b)
    out = jax.block_until_ready(out)

    ref = jax.block_until_ready(reference(y, x, w, b))
    np.testing.assert_allclose(np.asarray(out), np.asarray(ref),
                               rtol=1e-5, atol=1e-5)
    print("KERNEL_OK")
</pallas_src>

<mosaic_0001>
module attributes {stable_mosaic.version = 11 : i64} {
  func.func @rel_embed_kernel(%arg0: i32, %arg1: i32, %arg2: memref<1x8x3xf32, #tpu.memory_space<vmem>>, %arg3: memref<1x4x256xf32, #tpu.memory_space<vmem>>, %arg4: memref<4x256xf32, #tpu.memory_space<vmem>>, %arg5: memref<1x256xf32, #tpu.memory_space<vmem>>, %arg6: memref<1x8x256xf32, #tpu.memory_space<vmem>>) attributes {dimension_semantics = [#tpu.dimension_semantics<parallel>, #tpu.dimension_semantics<parallel>], iteration_bounds = array<i64: 2, 1>, scalar_prefetch = 0 : i64, scratch_operands = 0 : i64, tpu.core_type = #tpu.core_type<tc>, window_params = [{transform_indices = @transform_0, window_bounds = array<i64: 1, 8, 3>}, {transform_indices = @transform_1, window_bounds = array<i64: 1, 4, 256>}, {pipeline_mode = #tpu.pipeline_mode<synchronous>, transform_indices = @transform_2, window_bounds = array<i64: 4, 256>}, {pipeline_mode = #tpu.pipeline_mode<synchronous>, transform_indices = @transform_3, window_bounds = array<i64: 1, 256>}, {transform_indices = @transform_4, window_bounds = array<i64: 1, 8, 256>}]} {
    %c0 = arith.constant 0 : index
    %c0_0 = arith.constant 0 : index
    %c0_1 = arith.constant 0 : index
    %0 = vector.load %arg2[%c0, %c0_0, %c0_1] : memref<1x8x3xf32, #tpu.memory_space<vmem>>, vector<1x8x3xf32>
    %1 = vector.shape_cast %0 : vector<1x8x3xf32> to vector<8x3xf32>
    %2 = vector.extract_strided_slice %1 {offsets = [0, 0], sizes = [8, 1], strides = [1, 1]} : vector<8x3xf32> to vector<8x1xf32>
    %3 = vector.extract_strided_slice %1 {offsets = [0, 1], sizes = [8, 1], strides = [1, 1]} : vector<8x3xf32> to vector<8x1xf32>
    %4 = vector.extract_strided_slice %1 {offsets = [0, 2], sizes = [8, 1], strides = [1, 1]} : vector<8x3xf32> to vector<8x1xf32>
    %5 = math.cos %4 : vector<8x1xf32>
    %6 = math.sin %4 : vector<8x1xf32>
    %c0_2 = arith.constant 0 : index
    %c0_3 = arith.constant 0 : index
    %c0_4 = arith.constant 0 : index
    %7 = vector.load %arg3[%c0_2, %c0_3, %c0_4] : memref<1x4x256xf32, #tpu.memory_space<vmem>>, vector<1x4x256xf32>
    %8 = vector.shape_cast %7 : vector<1x4x256xf32> to vector<4x256xf32>
    %9 = vector.extract_strided_slice %8 {offsets = [0, 0], sizes = [1, 256], strides = [1, 1]} : vector<4x256xf32> to vector<1x256xf32>
    %10 = vector.extract_strided_slice %8 {offsets = [1, 0], sizes = [1, 256], strides = [1, 1]} : vector<4x256xf32> to vector<1x256xf32>
    %11 = vector.extract_strided_slice %8 {offsets = [2, 0], sizes = [1, 256], strides = [1, 1]} : vector<4x256xf32> to vector<1x256xf32>
    %12 = vector.extract_strided_slice %8 {offsets = [3, 0], sizes = [1, 256], strides = [1, 1]} : vector<4x256xf32> to vector<1x256xf32>
    %13 = vector.broadcast %9 : vector<1x256xf32> to vector<8x256xf32>
    %14 = vector.broadcast %2 : vector<8x1xf32> to vector<8x256xf32>
    %15 = arith.subf %13, %14 : vector<8x256xf32>
    %16 = vector.broadcast %10 : vector<1x256xf32> to vector<8x256xf32>
    %17 = vector.broadcast %3 : vector<8x1xf32> to vector<8x256xf32>
    %18 = arith.subf %16, %17 : vector<8x256xf32>
    %19 = vector.broadcast %5 : vector<8x1xf32> to vector<8x256xf32>
    %20 = arith.mulf %15, %19 : vector<8x256xf32>
    %21 = vector.broadcast %6 : vector<8x1xf32> to vector<8x256xf32>
    %22 = arith.mulf %18, %21 : vector<8x256xf32>
    %23 = arith.addf %20, %22 : vector<8x256xf32>
    %24 = vector.broadcast %5 : vector<8x1xf32> to vector<8x256xf32>
    %25 = arith.mulf %18, %24 : vector<8x256xf32>
    %26 = vector.broadcast %6 : vector<8x1xf32> to vector<8x256xf32>
    %27 = arith.mulf %15, %26 : vector<8x256xf32>
    %28 = arith.subf %25, %27 : vector<8x256xf32>
    %29 = vector.broadcast %11 : vector<1x256xf32> to vector<8x256xf32>
    %30 = vector.broadcast %5 : vector<8x1xf32> to vector<8x256xf32>
    %31 = arith.mulf %29, %30 : vector<8x256xf32>
    %32 = vector.broadcast %12 : vector<1x256xf32> to vector<8x256xf32>
    %33 = vector.broadcast %6 : vector<8x1xf32> to vector<8x256xf32>
    %34 = arith.mulf %32, %33 : vector<8x256xf32>
    %35 = arith.addf %31, %34 : vector<8x256xf32>
    %36 = vector.broadcast %12 : vector<1x256xf32> to vector<8x256xf32>
    %37 = vector.broadcast %5 : vector<8x1xf32> to vector<8x256xf32>
    %38 = arith.mulf %36, %37 : vector<8x256xf32>
    %39 = vector.broadcast %11 : vector<1x256xf32> to vector<8x256xf32>
    %40 = vector.broadcast %6 : vector<8x1xf32> to vector<8x256xf32>
    %41 = arith.mulf %39, %40 : vector<8x256xf32>
    %42 = arith.subf %38, %41 : vector<8x256xf32>
    %c0_5 = arith.constant 0 : index
    %c0_6 = arith.constant 0 : index
    %43 = vector.load %arg4[%c0_5, %c0_6] : memref<4x256xf32, #tpu.memory_space<vmem>>, vector<4x256xf32>
    %c0_7 = arith.constant 0 : index
    %c0_8 = arith.constant 0 : index
    %44 = vector.load %arg5[%c0_7, %c0_8] : memref<1x256xf32, #tpu.memory_space<vmem>>, vector<1x256xf32>
    %45 = vector.extract_strided_slice %43 {offsets = [0, 0], sizes = [1, 256], strides = [1, 1]} : vector<4x256xf32> to vector<1x256xf32>
    %46 = vector.broadcast %45 : vector<1x256xf32> to vector<8x256xf32>
    %47 = arith.mulf %23, %46 : vector<8x256xf32>
    %48 = vector.extract_strided_slice %43 {offsets = [1, 0], sizes = [1, 256], strides = [1, 1]} : vector<4x256xf32> to vector<1x256xf32>
    %49 = vector.broadcast %48 : vector<1x256xf32> to vector<8x256xf32>
    %50 = arith.mulf %28, %49 : vector<8x256xf32>
    %51 = arith.addf %47, %50 : vector<8x256xf32>
    %52 = vector.extract_strided_slice %43 {offsets = [2, 0], sizes = [1, 256], strides = [1, 1]} : vector<4x256xf32> to vector<1x256xf32>
    %53 = vector.broadcast %52 : vector<1x256xf32> to vector<8x256xf32>
    %54 = arith.mulf %35, %53 : vector<8x256xf32>
    %55 = arith.addf %51, %54 : vector<8x256xf32>
    %56 = vector.extract_strided_slice %43 {offsets = [3, 0], sizes = [1, 256], strides = [1, 1]} : vector<4x256xf32> to vector<1x256xf32>
    %57 = vector.broadcast %56 : vector<1x256xf32> to vector<8x256xf32>
    %58 = arith.mulf %42, %57 : vector<8x256xf32>
    %59 = arith.addf %55, %58 : vector<8x256xf32>
    %60 = vector.broadcast %44 : vector<1x256xf32> to vector<8x256xf32>
    %61 = arith.addf %59, %60 : vector<8x256xf32>
    %cst = arith.constant 0.000000e+00 : f32
    %62 = vector.broadcast %cst : f32 to vector<8x256xf32>
    %63 = arith.maximumf %61, %62 : vector<8x256xf32>
    %c0_9 = arith.constant 0 : index
    %c0_10 = arith.constant 0 : index
    %c0_11 = arith.constant 0 : index
    %64 = vector.load %arg6[%c0_9, %c0_10, %c0_11] : memref<1x8x256xf32, #tpu.memory_space<vmem>>, vector<1x8x256xf32>
    %65 = vector.shape_cast %64 : vector<1x8x256xf32> to vector<8x256xf32>
    %66 = vector.shape_cast %63 : vector<8x256xf32> to vector<1x8x256xf32>
    tpu.vector_store %arg6[%c0_9, %c0_10, %c0_11], %66 {strides = array<i32>} : memref<1x8x256xf32, #tpu.memory_space<vmem>>, vector<1x8x256xf32>,
    return
  }
  func.func @transform_0(%arg0: i32, %arg1: i32) -> (i32, i32, i32) {
    %c0_i32 = arith.constant 0 : i32
    %c0_i32_0 = arith.constant 0 : i32
    return %arg0, %arg1, %c0_i32 : i32, i32, i32
  }
  func.func @transform_1(%arg0: i32, %arg1: i32) -> (i32, i32, i32) {
    %c0_i32 = arith.constant 0 : i32
    %c0_i32_0 = arith.constant 0 : i32
    %c0_i32_1 = arith.constant 0 : i32
    return %arg0, %c0_i32, %c0_i32_0 : i32, i32, i32
  }
  func.func @transform_2(%arg0: i32, %arg1: i32) -> (i32, i32) {
    %c0_i32 = arith.constant 0 : i32
    %c0_i32_0 = arith.constant 0 : i32
    %c0_i32_1 = arith.constant 0 : i32
    return %c0_i32, %c0_i32_0 : i32, i32
  }
  func.func @transform_3(%arg0: i32, %arg1: i32) -> (i32, i32) {
    %c0_i32 = arith.constant 0 : i32
    %c0_i32_0 = arith.constant 0 : i32
    %c0_i32_1 = arith.constant 0 : i32
    return %c0_i32, %c0_i32_0 : i32, i32
  }
  func.func @transform_4(%arg0: i32, %arg1: i32) -> (i32, i32, i32) {
    %c0_i32 = arith.constant 0 : i32
    %c0_i32_0 = arith.constant 0 : i32
    return %arg0, %arg1, %c0_i32 : i32, i32, i32
  }
}

</mosaic_0001>

<llo_original>
// kernel: tpu_custom_call.1
$region0: #{tpu_custom_call.1}
  #allocation0 [shape = 'u32[]', space=smem, size = 0x4, offset = 0x4, fixed_abs, tag = 'smem constant byte address 0x4 - core index']
  #allocation1 [shape = 'u32[72,128]{1,0:T(1,128)}', space=vmem, size = 0x9000, scoped, tag = 'internal scratch']
  %s0 = inlined_call_operand.vmem [shape: f32[2,8,3], index: 0, kind: input, shape index: {}]
  %s1 = inlined_call_operand.vmem [shape: f32[2,4,256], index: 1, kind: input, shape index: {}]
  %s2 = inlined_call_operand.hbm [shape: f32[4,256], index: 2, kind: input, shape index: {}]
  %s3 = inlined_call_operand.vmem [shape: f32[1,256], index: 3, kind: input, shape index: {}]
  %s4 = inlined_call_operand.hbm [shape: f32[2,8,256], index: 4, kind: output, shape index: {}]
  %s5 = sld [smem:[#allocation0]]
  $region53: #{tpu_custom_call.1} parent=0
    _
  %s7 = ssub.s32 1, %s5
  %s8 = scalar_select 0, %s7, %s5
  $region1: #{tpu_custom_call.1} parent=0
    #allocation2 [shape = 'u8[4096]{0}', space=vmem, size = 0x1000, scoped, tag = 'input window, operand 2, single buffered']
    #allocation3 [shape = 's32[2]{0}', space=sflag, size = 0x8, scoped, tag = 'scoped memory for tpu_custom_call.1']
    #allocation4 [shape = 's32[2]{0}', space=sflag, size = 0x8, scoped, tag = 'scoped memory for tpu_custom_call.1']
    #allocation5 [shape = 'u8[16384]{0}', space=vmem, size = 0x4000, scoped, tag = 'output window, operand 0']
    %9 = vsyncpa [#allocation3], 0
    %10 = vsyncpa [#allocation4], 0
    %s11 = scalar_lea.sflag [#allocation4], 1
    %12 = vsyncpa %s11, 0
    loop: start=0, step=1, limit=4
    $region2: #{tpu_custom_call.1} parent=1 // loop_pre_header
      _
    $region3: #{tpu_custom_call.1} parent=1 // loop_header
      %s14 = sphi 0, %s18
      %p15 = scmp.ge.s32.totalorder %s14, 4
      %s21 = sphi 0, %s33
      %s22 = sphi 0, %s29
      %s23 = sphi 0, %s21
      %s24 = sphi 0, %s22
      %s25 = sphi 0, %s23
      %s26 = sphi 0, %s24
      %s38 = sphi 0, %s40
      %s41 = sphi 0, %s38
      %s42 = sphi 0, %s41
      %s58 = sphi 0, %s42
      %s64 = sphi 0, %s66
      %s67 = sphi 0, %s64
      %s68 = sphi 0, %s67
      %s84 = sphi 0, %s68
      %s88 = sphi 0, %s88
      %s90 = sphi 0, %s88
      %s91 = sphi 0, %s90
      %s105 = sphi 0, %s91
      %s109 = sphi 0, %s109
      %s111 = sphi 0, %s109
      %s112 = sphi 0, %s111
      %s126 = sphi 0, %s112
      %s134 = sphi 0, %s136
      %s137 = sphi 0, %s134
      %s138 = sphi 0, %s137
      %s154 = sphi 0, %s138
    $region4: #{tpu_custom_call.1} parent=1 // loop_header_branch
      %17 = sbr.rel (%p15) target = $region8
    $region5: #{tpu_custom_call.1} parent=1 // loop_body
      %s19 = ssub.s32 %s14, 1
      %s20 = ssub.s32 %s14, 2
      %s27 = sadd.s32 1, %s22
      %p28 = scmp.ge.s32.totalorder %s27, 1
      %s29 = scalar_select %p28, 0, %s27
      %s30 = sadd.s32 1, %s21
      %s31 = scalar_select %p28, %s30, %s21
      %p32 = scmp.ge.s32.totalorder %s31, 2
      %s33 = scalar_select %p32, 0, %s31
      %s34 = ssub.s32 %s21, %s33
      %s35 = ssub.s32 %s22, %s29
      %s36 = sor.u32 %s34, %s35
      %p37 = scmp.eq.s32.totalorder %s36, 0
      %s39 = sadd.s32 %s38, 1
      %s40 = scalar_select %p37, %s38, %s39
      %p43 = pneg %p37
      %p44 = scmp.eq.s32.totalorder %s14, 1
      %p45 = por %p43, %p44
      %p46 = scmp.ne.s32.totalorder %s38, %s41
      %p47 = scmp.eq.s32.totalorder %s14, 0
      %p48 = por %p46, %p47
      %p49 = scmp.ne.s32.totalorder %s38, %s41
      %p50 = scmp.eq.s32.totalorder %s19, 1
      %p51 = por %p49, %p50
      %p52 = scmp.ne.s32.totalorder %s41, %s42
      %p53 = scmp.eq.s32.totalorder %s19, 0
      %p54 = por %p52, %p53
      %p55 = scmp.ne.s32.totalorder %s41, %s42
      %p56 = scmp.eq.s32.totalorder %s20, 1
      %p57 = por %p55, %p56
      %p59 = scmp.ne.s32.totalorder %s42, %s58
      %p60 = scmp.eq.s32.totalorder %s20, 0
      %p61 = por %p59, %p60
      %s62 = ssub.s32 %s21, %s33
      %p63 = scmp.eq.s32.totalorder %s62, 0
      %s65 = sadd.s32 %s64, 1
      %s66 = scalar_select %p63, %s64, %s65
      %p69 = pneg %p63
      %p70 = scmp.eq.s32.totalorder %s14, 1
      %p71 = por %p69, %p70
      %p72 = scmp.ne.s32.totalorder %s64, %s67
      %p73 = scmp.eq.s32.totalorder %s14, 0
      %p74 = por %p72, %p73
      %p75 = scmp.ne.s32.totalorder %s64, %s67
      %p76 = scmp.eq.s32.totalorder %s19, 1
      %p77 = por %p75, %p76
      %p78 = scmp.ne.s32.totalorder %s67, %s68
      %p79 = scmp.eq.s32.totalorder %s19, 0
      %p80 = por %p78, %p79
      %p81 = scmp.ne.s32.totalorder %s67, %s68
      %p82 = scmp.eq.s32.totalorder %s20, 1
      %p83 = por %p81, %p82
      %p85 = scmp.ne.s32.totalorder %s68, %s84
      %p86 = scmp.eq.s32.totalorder %s20, 0
      %p87 = por %p85, %p86
      %s89 = sadd.s32 %s88, 1
      %p92 = scmp.eq.s32.totalorder %s14, 1
      %p93 = scmp.ne.s32.totalorder %s88, %s90
      %p94 = scmp.eq.s32.totalorder %s14, 0
      %p95 = por %p93, %p94
      %p96 = scmp.ne.s32.totalorder %s88, %s90
      %p97 = scmp.eq.s32.totalorder %s19, 1
      %p98 = por %p96, %p97
      %p99 = scmp.ne.s32.totalorder %s90, %s91
      %p100 = scmp.eq.s32.totalorder %s19, 0
      %p101 = por %p99, %p100
      %p102 = scmp.ne.s32.totalorder %s90, %s91
      %p103 = scmp.eq.s32.totalorder %s20, 1
      %p104 = por %p102, %p103
      %p106 = scmp.ne.s32.totalorder %s91, %s105
      %p107 = scmp.eq.s32.totalorder %s20, 0
      %p108 = por %p106, %p107
      %s110 = sadd.s32 %s109, 1
      %p113 = scmp.eq.s32.totalorder %s14, 1
      %p114 = scmp.ne.s32.totalorder %s109, %s111
      %p115 = scmp.eq.s32.totalorder %s14, 0
      %p116 = por %p114, %p115
      %p117 = scmp.ne.s32.totalorder %s109, %s111
      %p118 = scmp.eq.s32.totalorder %s19, 1
      %p119 = por %p117, %p118
      %p120 = scmp.ne.s32.totalorder %s111, %s112
      %p121 = scmp.eq.s32.totalorder %s19, 0
      %p122 = por %p120, %p121
      %p123 = scmp.ne.s32.totalorder %s111, %s112
      %p124 = scmp.eq.s32.totalorder %s20, 1
      %p125 = por %p123, %p124
      %p127 = scmp.ne.s32.totalorder %s112, %s126
      %p128 = scmp.eq.s32.totalorder %s20, 0
      %p129 = por %p127, %p128
      %s130 = ssub.s32 %s21, %s33
      %s131 = ssub.s32 %s22, %s29
      %s132 = sor.u32 %s130, %s131
      %p133 = scmp.eq.s32.totalorder %s132, 0
      %s135 = sadd.s32 %s134, 1
      %s136 = scalar_select %p133, %s134, %s135
      %p139 = pneg %p133
      %p140 = scmp.eq.s32.totalorder %s14, 1
      %p141 = por %p139, %p140
      %p142 = scmp.ne.s32.totalorder %s134, %s137
      %p143 = scmp.eq.s32.totalorder %s14, 0
      %p144 = por %p142, %p143
      %p145 = scmp.ne.s32.totalorder %s134, %s137
      %p146 = scmp.eq.s32.totalorder %s19, 1
      %p147 = por %p145, %p146
      %p148 = scmp.ne.s32.totalorder %s137, %s138
      %p149 = scmp.eq.s32.totalorder %s19, 0
      %p150 = por %p148, %p149
      %p151 = scmp.ne.s32.totalorder %s137, %s138
      %p152 = scmp.eq.s32.totalorder %s20, 1
      %p153 = por %p151, %p152
      %p155 = scmp.ne.s32.totalorder %s138, %s154
      %p156 = scmp.eq.s32.totalorder %s20, 0
      %p157 = por %p155, %p156
      %p158 = scmp.le.s32.totalorder 1, %s14
      %p159 = scmp.lt.s32.totalorder %s14, 3
      %p160 = pnand %p158, %p159
      %p161 = pneg %p160
      // Predicated region
      $region9: #{tpu_custom_call.1} parent=5 // pred_check
        _
      $region10: #{tpu_custom_call.1} parent=5 // pred_check_branch
        %163 = sbr.rel (%p160) target = $region12
      $region11: #{tpu_custom_call.1} parent=5 // pred_region
        %s164 = ssub.s32 %s14, 1
        // Predicated region
        $region13: #{tpu_custom_call.1} parent=11 // pred_check
          %p165 = pneg %p101
        $region14: #{tpu_custom_call.1} parent=11 // pred_check_branch
          %167 = sbr.rel (%p165) target = $region16
        $region15: #{tpu_custom_call.1} parent=11 // pred_region
          %169 = vsyncadd [#allocation3], 0
          %s171 = sshll.u32 %s2, 4
          %s172 = int_to_ptr.hbm [resolvable:$true] %s171
          %s173 = sshll.u32 [#allocation2], 4
          %s174 = int_to_ptr.vmem [resolvable:$true] %s173
          %176 = dma.hbm_to_vmem [thread:$0]  %s172, 128, %s174, [#allocation3]
        $region16: #{tpu_custom_call.1} parent=11 // pred_fallthru
          _
        // Predicated region
        $region17: #{tpu_custom_call.1} parent=11 // pred_check
          %p177 = pneg %p122
        $region18: #{tpu_custom_call.1} parent=11 // pred_check_branch
          %179 = sbr.rel (%p177) target = $region20
        $region19: #{tpu_custom_call.1} parent=11 // pred_region
          _
        $region20: #{tpu_custom_call.1} parent=11 // pred_fallthru
          _
      $region12: #{tpu_custom_call.1} parent=5 // pred_fallthru
        _
      %p180 = scmp.lt.s32.totalorder %s14, 2
      // Predicated region
      $region21: #{tpu_custom_call.1} parent=5 // pred_check
        %p181 = pneg %p180
      $region22: #{tpu_custom_call.1} parent=5 // pred_check_branch
        %183 = sbr.rel (%p181) target = $region24
      $region23: #{tpu_custom_call.1} parent=5 // pred_region
        // Predicated region
        $region25: #{tpu_custom_call.1} parent=23 // pred_check
          %p184 = pneg %p48
        $region26: #{tpu_custom_call.1} parent=23 // pred_check_branch
          %186 = sbr.rel (%p184) target = $region28
        $region27: #{tpu_custom_call.1} parent=23 // pred_region
          %p187 = scmp.lt.s32.totalorder %s21, 1
          %s188 = scalar_select %p187, %s21, 1
          %p189 = scmp.lt.s32.totalorder %s22, 0
          %s190 = scalar_select %p189, %s22, 0
          %s191 = sadd.s32 %s190, %s188
          %s192 = smul.addr %s191, 8
          %s193 = scalar_lea.vmem %s0, %s192
        $region28: #{tpu_custom_call.1} parent=23 // pred_fallthru
          _
        // Predicated region
        $region29: #{tpu_custom_call.1} parent=23 // pred_check
          %p194 = pneg %p74
        $region30: #{tpu_custom_call.1} parent=23 // pred_check_branch
          %196 = sbr.rel (%p194) target = $region32
        $region31: #{tpu_custom_call.1} parent=23 // pred_region
          %p197 = scmp.lt.s32.totalorder %s21, 1
          %s198 = scalar_select %p197, %s21, 1
          %s199 = smul.addr %s198, 2
          %s200 = smul.addr %s199, 4
          %s201 = scalar_lea.vmem %s1, %s200
        $region32: #{tpu_custom_call.1} parent=23 // pred_fallthru
          _
      $region24: #{tpu_custom_call.1} parent=5 // pred_fallthru
        _
      %p202 = scmp.le.s32.totalorder 1, %s14
      %p203 = scmp.lt.s32.totalorder %s14, 3
      %p204 = pnand %p202, %p203
      %p205 = pneg %p204
      // Predicated region
      $region33: #{tpu_custom_call.1} parent=5 // pred_check
        _
      $region34: #{tpu_custom_call.1} parent=5 // pred_check_branch
        %207 = sbr.rel (%p204) target = $region36
      $region35: #{tpu_custom_call.1} parent=5 // pred_region
        %s208 = ssub.s32 %s14, 1
        // Predicated region
        $region37: #{tpu_custom_call.1} parent=35 // pred_check
          %p209 = pneg %p101
        $region38: #{tpu_custom_call.1} parent=35 // pred_check_branch
          %211 = sbr.rel (%p209) target = $region40
        $region39: #{tpu_custom_call.1} parent=35 // pred_region
          %213 = dma.done [#allocation3], 128
        $region40: #{tpu_custom_call.1} parent=35 // pred_fallthru
          _
        %p214 = scmp.lt.s32.totalorder %s23, 1
        %s215 = scalar_select %p214, %s23, 1
        %p216 = scmp.lt.s32.totalorder %s24, 0
        %s217 = scalar_select %p216, %s24, 0
        %s218 = sadd.s32 %s217, %s215
        %s219 = smul.addr %s218, 8
        %s220 = scalar_lea.vmem %s0, %s219
        %p221 = pneg %p54
        %p222 = pneg %p51
        %p223 = scmp.lt.s32.totalorder %s23, 1
        %s224 = scalar_select %p223, %s23, 1
        %s225 = smul.addr %s224, 2
        %s226 = smul.addr %s225, 4
        %s227 = scalar_lea.vmem %s1, %s226
        %p228 = pneg %p80
        %p229 = pneg %p77
        %p230 = pneg %p101
        %p231 = pneg %p98
        %p232 = pneg %p122
        %p233 = pneg %p119
        %p234 = pneg %p150
        %p235 = pneg %p147
        %s236 = sand.u32 %s137, 1
        %s237 = scalar_lea.sflag [#allocation4], %s236
        %s238 = sand.u32 %s137, 1
        %s239 = smul.addr %s238, 16
        %s240 = scalar_lea.vmem [#allocation5], %s239
        %p241 = scmp.lt.s32.totalorder %s23, 1
        %s242 = scalar_select %p241, %s23, 1
        %p243 = scmp.lt.s32.totalorder %s24, 0
        %s244 = scalar_select %p243, %s24, 0
        %s245 = sadd.s32 %s244, %s242
        %s246 = smul.addr %s245, 8
        %s247 = scalar_lea.vmem %s0, %s246
        %p248 = scmp.lt.s32.totalorder %s23, 1
        %s249 = scalar_select %p248, %s23, 1
        %s250 = smul.addr %s249, 2
        %s251 = smul.addr %s250, 4
        %s252 = scalar_lea.vmem %s1, %s251
        %v253 = vld [vmem:[%s247] sm:$0xff]
        %v254 = vand.u32 2147483647, %v253
        %vm255 = vcmp.le.f32.partialorder %v254, 0.7853982
        %vm256 = vcmp.lt.s32.totalorder %v253, 0
        %v257 = vand.u32 %v253, 2139095040
        %v258 = vshrl.u32 %v257, 23
        %v259 = vsub.s32 %v258, 127
        %v260 = vand.u32 2147483647, %v253
        %v261 = vand.u32 %v260, 8388607
        %v262 = vor.u32 %v261, 8388608
        %v263 = vsub.s32 0, %v262
        %v264 = vadd.s32 %v259, 1
        %vm265 = vcmp.gt.s32.totalorder %v264, 0
        %v266 = vsel %vm265, %v264, 0
        %v267 = vshrl.u32 %v266, 5
        %v268 = vand.u32 %v266, 31
        %v269 = vsub.s32 32, %v268
        %v270 = vshrl.u32 683565275, %v269
        %v271 = vshll.u32 683565275, %v268
        %v272 = vshrl.u32 2475754826, %v269
        %v273 = vor.u32 %v271, %v272
        %v274 = vshll.u32 2475754826, %v268
        %v275 = vshrl.u32 2131351028, %v269
        %v276 = vor.u32 %v274, %v275
        %v277 = vshll.u32 2131351028, %v268
        %v278 = vshrl.u32 2102212464, %v269
        %v279 = vor.u32 %v277, %v278
        %v280 = vshll.u32 2102212464, %v268
        %v281 = vshrl.u32 920167782, %v269
        %v282 = vor.u32 %v280, %v281
        %v283 = vshll.u32 920167782, %v268
        %v284 = vshrl.u32 1326507024, %v269
        %v285 = vor.u32 %v283, %v284
        %vm286 = vcmp.lt.s32.totalorder %v267, 1
        %vm287 = vcmp.lt.s32.totalorder %v267, 2
        %vm288 = vcmp.lt.s32.totalorder %v267, 3
        %vm289 = vcmp.lt.s32.totalorder %v267, 4
        %v290 = vsel %vm286, %v270, %v273
        %v291 = vsel %vm289, %v279, 2102212464
        %v292 = vsel %vm288, %v276, %v291
        %v293 = vsel %vm287, %v290, %v292
        %v294 = vsel %vm286, %v273, %v276
        %v295 = vsel %vm289, %v282, 920167782
        %v296 = vsel %vm288, %v279, %v295
        %v297 = vsel %vm287, %v294, %v296
        %v298 = vsel %vm286, %v276, %v279
        %v299 = vsel %vm289, %v285, 1326507024
        %v300 = vsel %vm288, %v282, %v299
        %v301 = vsel %vm287, %v298, %v300
        %v302 = vshll.u32 %v262, 8
        %v303 = vand.u32 %v302, 65535
        %v304 = vshrl.u32 %v302, 16
        %v305 = vand.u32 %v301, 65535
        %v306 = vshrl.u32 %v301, 16
        %v307 = vmul.u32 %v303, %v305
        %v308 = vmul.u32 %v303, %v306
        %v309 = vmul.u32 %v304, %v305
        %v310 = vmul.u32 %v304, %v306
        %v311 = vshll.u32 %v308, 16
        %v312 = vshrl.u32 %v308, 16
        %v313 = vshll.u32 %v309, 16
        %v314 = vshrl.u32 %v309, 16
        %vm315 = vc.u32 %v307, %v311
        %v316 = vsel %vm315, 1, 0
        %v317 = vadd.s32 %v307, %v311
        %v318 = vadd.s32 %v310, %v316
        %vm319 = vc.u32 %v317, %v313
        %v320 = vsel %vm319, 1, 0
        %v321 = vadd.s32 %v317, %v313
        %v322 = vadd.s32 %v318, %v320
        %v323 = vadd.s32 %v322, %v312
        %v324 = vadd.s32 %v323, %v314
        %v325 = vand.u32 %v302, 65535
        %v326 = vshrl.u32 %v302, 16
        %v327 = vand.u32 %v297, 65535
        %v328 = vshrl.u32 %v297, 16
        %v329 = vmul.u32 %v325, %v327
        %v330 = vmul.u32 %v325, %v328
        %v331 = vmul.u32 %v326, %v327
        %v332 = vmul.u32 %v326, %v328
        %v333 = vshll.u32 %v330, 16
        %v334 = vshrl.u32 %v330, 16
        %v335 = vshll.u32 %v331, 16
        %v336 = vshrl.u32 %v331, 16
        %vm337 = vc.u32 %v329, %v333
        %v338 = vsel %vm337, 1, 0
        %v339 = vadd.s32 %v329, %v333
        %v340 = vadd.s32 %v332, %v338
        %vm341 = vc.u32 %v339, %v335
        %v342 = vsel %vm341, 1, 0
        %v343 = vadd.s32 %v339, %v335
        %v344 = vadd.s32 %v340, %v342
        %v345 = vadd.s32 %v344, %v334
        %v346 = vadd.s32 %v345, %v336
        %v347 = vmul.u32 %v302, %v293
        %v348 = vadd.s32 %v324, %v343
        %vm349 = vc.u32 %v324, %v343
        %v350 = vadd.s32 %v346, 1
        %v351 = vsel %vm349, %v350, %v346
        %v352 = vadd.s32 %v347, %v351
        %v353 = vadd.s32 %v352, 536870912
        %v354 = vshrl.u32 %v353, 30
        %v355 = vshll.u32 %v354, 30
        %v356 = vsub.s32 %v352, %v355
        %vm357 = vcmp.lt.s32.totalorder %v356, 0
        %v358 = vsub.s32 0, %v356
        %v359 = vsel %vm357, %v358, %v356
        %v360 = vclz %v359
        %v361 = vsub.s32 %v360, 2
        %vm362 = vcmp.gt.s32.totalorder 0, %v361
        %v363 = vsel %vm362, 0, %v361
        %v364 = vsub.s32 32, %v363
        %v365 = vshll.u32 %v356, %v363
        %v366 = vshrl.u32 %v348, %v364
        %v367 = vor.u32 %v365, %v366
        %v368 = vsub.s32 4294967266, %v363
        %v369 = vadd.s32 %v368, 127
        %v370 = vshll.u32 %v369, 23
        %v371 = vor.u32 4788187, %v370
        %v372 = vand.u32 2147483647, %v371
        %v374 = vcvt.s32.f32 %v367
        %v375 = vmul.f32 %v374, %v372
        %v376 = vxor.u32 %v375, 2147483648
        %v377 = vsel %vm256, %v376, %v375
        %v378 = vsub.s32 4, %v354
        %v379 = vsel %vm256, %v378, %v354
        %v380 = vsel %vm255, %v253, %v377
        %v381 = vsel %vm255, 0, %v379
        %v382 = vmul.f32 %v380, %v380
        %v383 = vmul.f32 %v382, -0.001358992
        %v384 = vadd.f32 %v383, 0.041655596
        %v385 = vmul.f32 %v382, %v384
        %v386 = vadd.f32 %v385, -0.4999988
        %v387 = vmul.f32 %v382, %v386
        %v388 = vadd.f32 1.0, %v387
        %v389 = vmul.f32 %v380, %v380
        %v390 = vmul.f32 %v389, -0.00019511016
        %v391 = vadd.f32 %v390, 0.008332121
        %v392 = vmul.f32 %v389, %v391
        %v393 = vadd.f32 %v392, -0.16666654
        %v394 = vmul.f32 %v389, %v393
        %v395 = vadd.f32 %v394, 1.0
        %v396 = vmul.f32 %v395, %v380
        %vm397 = vweird.f32 %v253
        %v398 = vand.u32 %v381, 3
        %vm399 = vcmp.lt.s32.totalorder %v398, 2
        %vm400 = vcmp.eq.s32.totalorder %v398, 0
        %v401 = vxor.u32 %v396, 2147483648
        %v402 = vsel %vm400, %v388, %v401
        %vm403 = vcmp.eq.s32.totalorder %v398, 2
        %v404 = vxor.u32 %v388, 2147483648
        %v405 = vsel %vm403, %v404, %v396
        %v406 = vsel %vm399, %v402, %v405
        %v407 = vsel %vm397, nan, %v406
        %v408 = vand.u32 2147483647, %v253
        %vm409 = vcmp.le.f32.partialorder %v408, 0.7853982
        %vm410 = vcmp.lt.s32.totalorder %v253, 0
        %v411 = vand.u32 %v253, 2139095040
        %v412 = vshrl.u32 %v411, 23
        %v413 = vsub.s32 %v412, 127
        %v414 = vand.u32 2147483647, %v253
        %v415 = vand.u32 %v414, 8388607
        %v416 = vor.u32 %v415, 8388608
        %v417 = vsub.s32 0, %v416
        %v418 = vadd.s32 %v413, 1
        %vm419 = vcmp.gt.s32.totalorder %v418, 0
        %v420 = vsel %vm419, %v418, 0
        %v421 = vshrl.u32 %v420, 5
        %v422 = vand.u32 %v420, 31
        %v423 = vsub.s32 32, %v422
        %v424 = vshrl.u32 683565275, %v423
        %v425 = vshll.u32 683565275, %v422
        %v426 = vshrl.u32 2475754826, %v423
        %v427 = vor.u32 %v425, %v426
        %v428 = vshll.u32 2475754826, %v422
        %v429 = vshrl.u32 2131351028, %v423
        %v430 = vor.u32 %v428, %v429
        %v431 = vshll.u32 2131351028, %v422
        %v432 = vshrl.u32 2102212464, %v423
        %v433 = vor.u32 %v431, %v432
        %v434 = vshll.u32 2102212464, %v422
        %v435 = vshrl.u32 920167782, %v423
        %v436 = vor.u32 %v434, %v435
        %v437 = vshll.u32 920167782, %v422
        %v438 = vshrl.u32 1326507024, %v423
        %v439 = vor.u32 %v437, %v438
        %vm440 = vcmp.lt.s32.totalorder %v421, 1
        %vm441 = vcmp.lt.s32.totalorder %v421, 2
        %vm442 = vcmp.lt.s32.totalorder %v421, 3
        %vm443 = vcmp.lt.s32.totalorder %v421, 4
        %v444 = vsel %vm440, %v424, %v427
        %v445 = vsel %vm443, %v433, 2102212464
        %v446 = vsel %vm442, %v430, %v445
        %v447 = vsel %vm441, %v444, %v446
        %v448 = vsel %vm440, %v427, %v430
        %v449 = vsel %vm443, %v436, 920167782
        %v450 = vsel %vm442, %v433, %v449
        %v451 = vsel %vm441, %v448, %v450
        %v452 = vsel %vm440, %v430, %v433
        %v453 = vsel %vm443, %v439, 1326507024
        %v454 = vsel %vm442, %v436, %v453
        %v455 = vsel %vm441, %v452, %v454
        %v456 = vshll.u32 %v416, 8
        %v457 = vand.u32 %v456, 65535
        %v458 = vshrl.u32 %v456, 16
        %v459 = vand.u32 %v455, 65535
        %v460 = vshrl.u32 %v455, 16
        %v461 = vmul.u32 %v457, %v459
        %v462 = vmul.u32 %v457, %v460
        %v463 = vmul.u32 %v458, %v459
        %v464 = vmul.u32 %v458, %v460
        %v465 = vshll.u32 %v462, 16
        %v466 = vshrl.u32 %v462, 16
        %v467 = vshll.u32 %v463, 16
        %v468 = vshrl.u32 %v463, 16
        %vm469 = vc.u32 %v461, %v465
        %v470 = vsel %vm469, 1, 0
        %v471 = vadd.s32 %v461, %v465
        %v472 = vadd.s32 %v464, %v470
        %vm473 = vc.u32 %v471, %v467
        %v474 = vsel %vm473, 1, 0
        %v475 = vadd.s32 %v471, %v467
        %v476 = vadd.s32 %v472, %v474
        %v477 = vadd.s32 %v476, %v466
        %v478 = vadd.s32 %v477, %v468
        %v479 = vand.u32 %v456, 65535
        %v480 = vshrl.u32 %v456, 16
        %v481 = vand.u32 %v451, 65535
        %v482 = vshrl.u32 %v451, 16
        %v483 = vmul.u32 %v479, %v481
        %v484 = vmul.u32 %v479, %v482
        %v485 = vmul.u32 %v480, %v481
        %v486 = vmul.u32 %v480, %v482
        %v487 = vshll.u32 %v484, 16
        %v488 = vshrl.u32 %v484, 16
        %v489 = vshll.u32 %v485, 16
        %v490 = vshrl.u32 %v485, 16
        %vm491 = vc.u32 %v483, %v487
        %v492 = vsel %vm491, 1, 0
        %v493 = vadd.s32 %v483, %v487
        %v494 = vadd.s32 %v486, %v492
        %vm495 = vc.u32 %v493, %v489
        %v496 = vsel %vm495, 1, 0
        %v497 = vadd.s32 %v493, %v489
        %v498 = vadd.s32 %v494, %v496
        %v499 = vadd.s32 %v498, %v488
        %v500 = vadd.s32 %v499, %v490
        %v501 = vmul.u32 %v456, %v447
        %v502 = vadd.s32 %v478, %v497
        %vm503 = vc.u32 %v478, %v497
        %v504 = vadd.s32 %v500, 1
        %v505 = vsel %vm503, %v504, %v500
        %v506 = vadd.s32 %v501, %v505
        %v507 = vadd.s32 %v506, 536870912
        %v508 = vshrl.u32 %v507, 30
        %v509 = vshll.u32 %v508, 30
        %v510 = vsub.s32 %v506, %v509
        %vm511 = vcmp.lt.s32.totalorder %v510, 0
        %v512 = vsub.s32 0, %v510
        %v513 = vsel %vm511, %v512, %v510
        %v514 = vclz %v513
        %v515 = vsub.s32 %v514, 2
        %vm516 = vcmp.gt.s32.totalorder 0, %v515
        %v517 = vsel %vm516, 0, %v515
        %v518 = vsub.s32 32, %v517
        %v519 = vshll.u32 %v510, %v517
        %v520 = vshrl.u32 %v502, %v518
        %v521 = vor.u32 %v519, %v520
        %v522 = vsub.s32 4294967266, %v517
        %v523 = vadd.s32 %v522, 127
        %v524 = vshll.u32 %v523, 23
        %v525 = vor.u32 4788187, %v524
        %v526 = vand.u32 2147483647, %v525
        %v528 = vcvt.s32.f32 %v521
        %v529 = vmul.f32 %v528, %v526
        %v530 = vxor.u32 %v529, 2147483648
        %v531 = vsel %vm410, %v530, %v529
        %v532 = vsub.s32 4, %v508
        %v533 = vsel %vm410, %v532, %v508
        %v534 = vsel %vm409, %v253, %v531
        %v535 = vsel %vm409, 0, %v533
        %v536 = vmul.f32 %v534, %v534
        %v537 = vmul.f32 %v536, -0.001358992
        %v538 = vadd.f32 %v537, 0.041655596
        %v539 = vmul.f32 %v536, %v538
        %v540 = vadd.f32 %v539, -0.4999988
        %v541 = vmul.f32 %v536, %v540
        %v542 = vadd.f32 1.0, %v541
        %v543 = vmul.f32 %v534, %v534
        %v544 = vmul.f32 %v543, -0.00019511016
        %v545 = vadd.f32 %v544, 0.008332121
        %v546 = vmul.f32 %v543, %v545
        %v547 = vadd.f32 %v546, -0.16666654
        %v548 = vmul.f32 %v543, %v547
        %v549 = vadd.f32 %v548, 1.0
        %v550 = vmul.f32 %v549, %v534
        %vm551 = vweird.f32 %v253
        %v552 = vadd.s32 %v535, 3
        %v553 = vand.u32 %v552, 3
        %vm554 = vcmp.lt.s32.totalorder %v553, 2
        %vm555 = vcmp.eq.s32.totalorder %v553, 0
        %v556 = vxor.u32 %v550, 2147483648
        %v557 = vsel %vm555, %v542, %v556
        %vm558 = vcmp.eq.s32.totalorder %v553, 2
        %v559 = vxor.u32 %v542, 2147483648
        %v560 = vsel %vm558, %v559, %v550
        %v561 = vsel %vm554, %v557, %v560
        %v562 = vsel %vm551, nan, %v561
        %v563 = vld [vmem:[%s252] sm:$0xff]
        %v565 = vperm.slane %v563, 0
        %v566 = vperm.slane %v563, 4
        %v569 = vperm.slane %v565, 0
        %v570 = vperm.slane %v566, 0
        %572 = vset.pattern.permute.xlu0 0
        %573 = vperm.xlu0 %572, %v253
        %v574 = vpop.permute.xlu0 %573
        %v576 = vsub.f32 %v569, %v574
        %v577 = vsub.f32 %v570, %v574
        %v578 = vperm.slane %v563, 1
        %v579 = vperm.slane %v563, 5
        %v582 = vperm.slane %v578, 1
        %v583 = vperm.slane %v579, 1
        %584 = vset.pattern.permute.xlu0 1
        %585 = vperm.xlu0 %584, %v253
        %v586 = vpop.permute.xlu0 %585
        %v588 = vsub.f32 %v582, %v586
        %v589 = vsub.f32 %v583, %v586
        %591 = vset.pattern.permute.xlu0 2
        %592 = vperm.xlu0 %591, %v407
        %v593 = vpop.permute.xlu0 %592
        %v595 = vmul.f32 %v576, %v593
        %v596 = vmul.f32 %v577, %v593
        %598 = vset.pattern.permute.xlu0 2
        %599 = vperm.xlu0 %598, %v562
        %v600 = vpop.permute.xlu0 %599
        %v602 = vmul.f32 %v588, %v600
        %v603 = vmul.f32 %v589, %v600
        %v604 = vadd.f32 %v595, %v602
        %v605 = vadd.f32 %v596, %v603
        %v606 = vmul.f32 %v588, %v593
        %v607 = vmul.f32 %v589, %v593
        %v608 = vmul.f32 %v576, %v600
        %v609 = vmul.f32 %v577, %v600
        %v610 = vsub.f32 %v606, %v608
        %v611 = vsub.f32 %v607, %v609
        %v612 = vperm.slane %v563, 2
        %v613 = vperm.slane %v563, 6
        %v616 = vperm.slane %v612, 2
        %v617 = vperm.slane %v613, 2
        %v618 = vmul.f32 %v616, %v593
        %v619 = vmul.f32 %v617, %v593
        %v620 = vperm.slane %v563, 3
        %v621 = vperm.slane %v563, 7
        %v624 = vperm.slane %v620, 3
        %v625 = vperm.slane %v621, 3
        %v626 = vmul.f32 %v624, %v600
        %v627 = vmul.f32 %v625, %v600
        %v628 = vadd.f32 %v618, %v626
        %v629 = vadd.f32 %v619, %v627
        %v630 = vmul.f32 %v624, %v593
        %v631 = vmul.f32 %v625, %v593
        %v632 = vmul.f32 %v616, %v600
        %v633 = vmul.f32 %v617, %v600
        %v634 = vsub.f32 %v630, %v632
        %v635 = vsub.f32 %v631, %v633
        %v636 = vld [vmem:[#allocation2] sm:$0xff]
        %v637 = vld [vmem:[%s3] sm:$0x3]
        %v639 = vperm.slane %v636, 0
        %v640 = vperm.slane %v636, 4
        %v643 = vperm.slane %v639, 0
        %v644 = vperm.slane %v640, 0
        %v645 = vmul.f32 %v604, %v643
        %v646 = vmul.f32 %v605, %v644
        %v647 = vperm.slane %v636, 1
        %v648 = vperm.slane %v636, 5
        %v651 = vperm.slane %v647, 1
        %v652 = vperm.slane %v648, 1
        %v653 = vmul.f32 %v610, %v651
        %v654 = vmul.f32 %v611, %v652
        %v655 = vadd.f32 %v645, %v653
        %v656 = vadd.f32 %v646, %v654
        %v657 = vperm.slane %v636, 2
        %v658 = vperm.slane %v636, 6
        %v661 = vperm.slane %v657, 2
        %v662 = vperm.slane %v658, 2
        %v663 = vmul.f32 %v628, %v661
        %v664 = vmul.f32 %v629, %v662
        %v665 = vadd.f32 %v655, %v663
        %v666 = vadd.f32 %v656, %v664
        %v667 = vperm.slane %v636, 3
        %v668 = vperm.slane %v636, 7
        %v671 = vperm.slane %v667, 3
        %v672 = vperm.slane %v668, 3
        %v673 = vmul.f32 %v634, %v671
        %v674 = vmul.f32 %v635, %v672
        %v675 = vadd.f32 %v665, %v673
        %v676 = vadd.f32 %v666, %v674
        %v678 = vperm.slane %v637, 0
        %v679 = vperm.slane %v637, 1
        %v682 = vadd.f32 %v675, %v678
        %v683 = vadd.f32 %v676, %v679
        %v684 = vmax.f32 %v682, 0.0
        %v685 = vmax.f32 %v683, 0.0
        %686 = vst [vmem:[%s240] sm:$0xff] %v684
        %687 = vst [vmem:[%s240 + $0x8] sm:$0xff] %v685
        %s688 = sand.u32 %s137, 1
        %s689 = scalar_lea.sflag [#allocation4], %s688
        %s690 = sand.u32 %s137, 1
        %s691 = smul.addr %s690, 16
        %s692 = scalar_lea.vmem [#allocation5], %s691
        // Predicated region
        $region41: #{tpu_custom_call.1} parent=35 // pred_check
          %p693 = pneg %p147
        $region42: #{tpu_custom_call.1} parent=35 // pred_check_branch
          %695 = sbr.rel (%p693) target = $region44
        $region43: #{tpu_custom_call.1} parent=35 // pred_region
          %697 = vsyncadd %s689, 0
          %s698 = smul.addr %s24, 2
          %s699 = smul.addr %s23, 2
          %s700 = sadd.s32 %s698, %s699
          %s701 = smul.addr %s700, 8
          %s702 = scalar_lea.hbm %s4, %s701
          %s704 = sshll.u32 %s692, 4
          %s705 = int_to_ptr.vmem [resolvable:$true] %s704
          %s706 = sshll.u32 %s702, 4
          %s707 = int_to_ptr.hbm [resolvable:$true] %s706
          %709 = dma.vmem_to_hbm [thread:$0]  %s705, 256, %s707, %s689
        $region44: #{tpu_custom_call.1} parent=35 // pred_fallthru
          _
      $region36: #{tpu_custom_call.1} parent=5 // pred_fallthru
        _
      %p710 = scmp.le.s32.totalorder 2, %s14
      // Predicated region
      $region45: #{tpu_custom_call.1} parent=5 // pred_check
        %p711 = pneg %p710
      $region46: #{tpu_custom_call.1} parent=5 // pred_check_branch
        %713 = sbr.rel (%p711) target = $region48
      $region47: #{tpu_custom_call.1} parent=5 // pred_region
        %s714 = ssub.s32 %s14, 2
        // Predicated region
        $region49: #{tpu_custom_call.1} parent=47 // pred_check
          %p715 = pneg %p153
        $region50: #{tpu_custom_call.1} parent=47 // pred_check_branch
          %717 = sbr.rel (%p715) target = $region52
        $region51: #{tpu_custom_call.1} parent=47 // pred_region
          %s718 = sand.u32 %s138, 1
          %s719 = scalar_lea.sflag [#allocation4], %s718
          %s720 = sand.u32 %s138, 1
          %s721 = smul.addr %s720, 16
          %s722 = scalar_lea.vmem [#allocation5], %s721
          %724 = dma.done %s719, 256
        $region52: #{tpu_custom_call.1} parent=47 // pred_fallthru
          _
      $region48: #{tpu_custom_call.1} parent=5 // pred_fallthru
        _
    $region6: #{tpu_custom_call.1} parent=1 // loop_footer
      %s18 = sadd.s32 1, %s14
    $region7: #{tpu_custom_call.1} parent=1 // loop_footer_branch
      %13 = sbr.rel target = $region3
    $region8: #{tpu_custom_call.1} parent=1 // loop_exit
      _
    %725 = vsyncpa [#allocation3], 1
    %s726 = scalar_lea.sflag [#allocation3], 1
    %727 = vsyncpa %s726, 1
    %728 = vsyncpa [#allocation4], 1
    %s729 = scalar_lea.sflag [#allocation4], 1
    %730 = vsyncpa %s729, 1

</llo_original>
